<compile_context>
chip_gen: v5e
topology: v5e:2x2
jax: 0.10.0
libtpu: 0.0.40
codegen_flags: <defaults>
</compile_context>

<pallas_src>
import functools

import jax
import jax.numpy as jnp
from jax.experimental import pallas as pl
from jax.experimental.pallas import tpu as pltpu


def _round_up(x, m):
    return ((x + m - 1) // m) * m


def _vmem_capacity_bytes():
    """Trace-time physical-VMEM query; conservative (v7x) default on failure."""
    try:
        info = pltpu.get_tpu_info()
        for name in ("vmem_capacity_bytes", "vmem_bytes", "vmem_size_bytes"):
            v = getattr(info, name, None)
            if v:
                return int(v)
    except Exception:
        pass
    return 64 << 20


# ----------------------------------------------------------------------------
# Kernels
# ----------------------------------------------------------------------------
def _folded_kernel(z_ref, out_ref, beta_ref, *, n_views, feat):
    """Block layout (rows, n_views*feat): each row packs the M views of one
    batch element along lanes; softmax groups are M chunks of width `feat`."""
    zf = z_ref[...].astype(jnp.float32)
    # tanh(z) in [-1, 1] => exp never overflows; skipping max-subtraction is
    # mathematically identical to softmax here.
    e = jnp.exp(jnp.tanh(zf))

    # Group sum over the M lane-chunks via circular lane rolls (XLU slot).
    # The result is already broadcast to every lane of its group.  Requires
    # the block's lane extent to be exactly n_views*feat (guaranteed by the
    # wrapper), so the circular roll never mixes different batch rows.
    span = n_views * feat
    s = e
    if n_views & (n_views - 1) == 0:          # power of two: log2(M) rolls
        shift = feat
        while shift < span:
            s = s + pltpu.roll(s, shift=shift, axis=1)
            shift *= 2
    else:                                     # general M: M-1 rolls
        for k in range(1, n_views):
            s = s + pltpu.roll(e, shift=k * feat, axis=1)

    approx = jnp.dtype(beta_ref.dtype) == jnp.bfloat16
    inv = pl.reciprocal(s, approx=approx)
    beta_ref[...] = (e * inv).astype(beta_ref.dtype)
    out_ref[...] = ((e * zf) * inv).astype(out_ref.dtype)


def _native_kernel(z_ref, out_ref, beta_ref):
    """Fallback block layout (bN, M, bD); softmax axis 1 is fully in-block."""
    zf = z_ref[...].astype(jnp.float32)
    e = jnp.exp(jnp.tanh(zf))                 # bounded, no max needed
    s = jnp.sum(e, axis=1, keepdims=True)
    approx = jnp.dtype(beta_ref.dtype) == jnp.bfloat16
    inv = pl.reciprocal(s, approx=approx)
    beta_ref[...] = (e * inv).astype(beta_ref.dtype)
    out_ref[...] = ((e * zf) * inv).astype(out_ref.dtype)


# ----------------------------------------------------------------------------
# Wrapper
# ----------------------------------------------------------------------------
@jax.jit
def attention(z):
    """Returns (beta * z, beta) with beta = softmax(tanh(z), axis=1).

    Args:
      z: array of shape (N, M, D), float32 or bfloat16.
    Returns:
      (out, beta), each of shape (N, M, D) and dtype of z.
    """
    N, M, D = z.shape
    itemsize = jnp.dtype(z.dtype).itemsize
    n_elems = N * M * D

    # Generation-aware budgets: v5e/v6e have 128 MiB physical VMEM, v7x 64 MiB.
    vmem_cap = _vmem_capacity_bytes()
    big_vmem = vmem_cap >= (96 << 20)
    vmem_limit = (64 << 20) if big_vmem else (48 << 20)
    budget = int(0.7 * vmem_limit)
    # In-flight bytes per tile element: (1 in + 2 out) double-buffered at the
    # I/O dtype, plus ~4 f32 temporaries (zf, e, s, beta) inside the kernel.
    per_elem = 6 * itemsize + 4 * 4
    max_tile_elems = max(8 * 128, budget // per_elem)

    cost = pl.CostEstimate(flops=5 * n_elems,
                           transcendentals=2 * n_elems,      # tanh + exp
                           bytes_accessed=3 * n_elems * itemsize)

    def params(n_axes):
        return pltpu.CompilerParams(
            dimension_semantics=("parallel",) * n_axes,
            vmem_limit_bytes=vmem_limit)

    L = M * D

    # ---- Main path: fold views*features onto the lane axis ------------------
    # (N, M, D) -> (N, M*D) is a free row-major merge (no data movement), so
    # stores are lane-dense and no wrapper transposes are needed.  The softmax
    # axis (M) stays wholly inside every block: no cross-tile reduction.
    if L % 128 == 0 and 8 * L <= max_tile_elems:
        z2 = z.reshape(N, L)
        rows_fit = max_tile_elems // L
        if N <= 8 or rows_fit >= N:
            bN = N
            if N >= 16:
                # >= 2 grid steps: keeps both v7x TensorCores busy and lets the
                # Pallas pipeline overlap DMA with compute.
                bN = min(N, max(8, _round_up(pl.cdiv(N, 2), 8)))
        else:
            bN = max(8, (rows_fit // 8) * 8)   # multiple of 8 (sublane rule)
        grid = (pl.cdiv(N, bN),)
        spec = pl.BlockSpec((bN, L), lambda i: (i, 0))
        out2, beta2 = pl.pallas_call(
            functools.partial(_folded_kernel, n_views=M, feat=D),
            out_shape=(jax.ShapeDtypeStruct((N, L), z.dtype),
                       jax.ShapeDtypeStruct((N, L), z.dtype)),
            grid=grid,
            in_specs=[spec],
            out_specs=(spec, spec),
            compiler_params=params(1),
            cost_estimate=cost,
        )(z2)
        return out2.reshape(N, M, D), beta2.reshape(N, M, D)

    # ---- Fallback: native (bN, M, bD) blocks --------------------------------
    # Used only when M*D is not a multiple of 128 (or a single 8-row folded
    # block would blow the VMEM budget).  Full M per block by construction.
    M_pad = _round_up(M, 8)                    # account for sublane padding
    if D % 128 == 0:
        bD = min(D, max(128, ((max_tile_elems // (8 * M_pad)) // 128) * 128))
    else:
        bD = D                                 # unaligned D must stay whole
    d_pad = _round_up(bD, 128)
    bN = max(1, min(N, max_tile_elems // (M_pad * d_pad)))
    if pl.cdiv(N, bN) * pl.cdiv(D, bD) == 1 and N >= 2:
        bN = pl.cdiv(N, 2)                     # >= 2 grid steps (v7x / overlap)
    grid = (pl.cdiv(N, bN), pl.cdiv(D, bD))
    spec = pl.BlockSpec((bN, M, bD), lambda i, j: (i, 0, j))
    return pl.pallas_call(
        _native_kernel,
        out_shape=(jax.ShapeDtypeStruct((N, M, D), z.dtype),
                   jax.ShapeDtypeStruct((N, M, D), z.dtype)),
        grid=grid,
        in_specs=[spec],
        out_specs=(spec, spec),
        compiler_params=params(2),
        cost_estimate=cost,
    )(z)


# ----------------------------------------------------------------------------
# Reference + checks
# ----------------------------------------------------------------------------
def _reference(z):
    zf = z.astype(jnp.float32)
    w = jnp.tanh(zf)
    beta = jax.nn.softmax(w, axis=1)
    return beta * zf, beta


def _check(z, atol, rtol):
    out, beta = attention(z)
    out = jax.block_until_ready(out)
    beta = jax.block_until_ready(beta)
    ref_out, ref_beta = _reference(z)
    assert out.shape == z.shape and beta.shape == z.shape
    assert out.dtype == z.dtype and beta.dtype == z.dtype
    assert jnp.allclose(out.astype(jnp.float32), ref_out, atol=atol, rtol=rtol), "out mismatch"
    assert jnp.allclose(beta.astype(jnp.float32), ref_beta, atol=atol, rtol=rtol), "beta mismatch"


if __name__ == "__main__":
    key = jax.random.PRNGKey(0)
    k1, k2, k3, k4, k5, k6 = jax.random.split(key, 6)

    # Small shapes consistent with the module: (batch N, views M, features D).
    _check(jax.random.normal(k1, (2, 4, 32), jnp.float32), 1e-5, 1e-5)    # folded, M*D = 128
    _check(jax.random.normal(k2, (8, 4, 32), jnp.float32), 1e-5, 1e-5)    # folded
    _check(jax.random.normal(k3, (4, 6, 256), jnp.float32), 1e-5, 1e-5)   # folded, non-pow2 M
    _check(jax.random.normal(k4, (20, 4, 32), jnp.float32), 1e-5, 1e-5)   # folded, 2-step grid + remainder
    _check(jax.random.normal(k5, (2, 3, 48), jnp.float32), 1e-5, 1e-5)    # 3-D fallback (M*D % 128 != 0)
    _check(jax.random.normal(k6, (8, 4, 32), jnp.float32).astype(jnp.bfloat16),
           1e-2, 1e-2)                                                    # bf16 I/O, f32 compute

    print("KERNEL_OK")
</pallas_src>

<mosaic_0001>
module attributes {stable_mosaic.version = 11 : i64} {
  func.func @_folded_kernel(%arg0: i32, %arg1: memref<2x128xf32, #tpu.memory_space<vmem>>, %arg2: memref<2x128xf32, #tpu.memory_space<vmem>>, %arg3: memref<2x128xf32, #tpu.memory_space<vmem>>) attributes {dimension_semantics = [#tpu.dimension_semantics<parallel>], iteration_bounds = array<i64: 1>, scalar_prefetch = 0 : i64, scratch_operands = 0 : i64, tpu.core_type = #tpu.core_type<tc>, window_params = [{transform_indices = @transform_0, window_bounds = array<i64: 2, 128>}, {transform_indices = @transform_1, window_bounds = array<i64: 2, 128>}, {transform_indices = @transform_2, window_bounds = array<i64: 2, 128>}]} {
    %c0 = arith.constant 0 : index
    %c0_0 = arith.constant 0 : index
    %0 = vector.load %arg1[%c0, %c0_0] : memref<2x128xf32, #tpu.memory_space<vmem>>, vector<2x128xf32>
    %1 = math.tanh %0 : vector<2x128xf32>
    %2 = math.exp %1 : vector<2x128xf32>
    %c32_i32 = arith.constant 32 : i32
    %3 = tpu.dynamic_rotate %2 by %c32_i32 dim 1 : vector<2x128xf32>, i32 -> vector<2x128xf32>
    %4 = arith.addf %2, %3 : vector<2x128xf32>
    %c64_i32 = arith.constant 64 : i32
    %5 = tpu.dynamic_rotate %4 by %c64_i32 dim 1 : vector<2x128xf32>, i32 -> vector<2x128xf32>
    %6 = arith.addf %4, %5 : vector<2x128xf32>
    %7 = tpu.reciprocal %6 : vector<2x128xf32> -> vector<2x128xf32>
    %8 = arith.mulf %2, %7 : vector<2x128xf32>
    %c0_1 = arith.constant 0 : index
    %c0_2 = arith.constant 0 : index
    %9 = vector.load %arg3[%c0_1, %c0_2] : memref<2x128xf32, #tpu.memory_space<vmem>>, vector<2x128xf32>
    tpu.vector_store %arg3[%c0_1, %c0_2], %8 {strides = array<i32>} : memref<2x128xf32, #tpu.memory_space<vmem>>, vector<2x128xf32>,
    %10 = arith.mulf %2, %0 : vector<2x128xf32>
    %11 = arith.mulf %10, %7 : vector<2x128xf32>
    %c0_3 = arith.constant 0 : index
    %c0_4 = arith.constant 0 : index
    %12 = vector.load %arg2[%c0_3, %c0_4] : memref<2x128xf32, #tpu.memory_space<vmem>>, vector<2x128xf32>
    tpu.vector_store %arg2[%c0_3, %c0_4], %11 {strides = array<i32>} : memref<2x128xf32, #tpu.memory_space<vmem>>, vector<2x128xf32>,
    return
  }
  func.func @transform_0(%arg0: i32) -> (i32, i32) {
    %c0_i32 = arith.constant 0 : i32
    %c0_i32_0 = arith.constant 0 : i32
    return %arg0, %c0_i32 : i32, i32
  }
  func.func @transform_1(%arg0: i32) -> (i32, i32) {
    %c0_i32 = arith.constant 0 : i32
    %c0_i32_0 = arith.constant 0 : i32
    return %arg0, %c0_i32 : i32, i32
  }
  func.func @transform_2(%arg0: i32) -> (i32, i32) {
    %c0_i32 = arith.constant 0 : i32
    %c0_i32_0 = arith.constant 0 : i32
    return %arg0, %c0_i32 : i32, i32
  }
}

</mosaic_0001>

<llo_original>
// kernel: attention.1
$region0: #{attention.1}
  #allocation0 [shape = 'u32[]', space=smem, size = 0x4, offset = 0x4, fixed_abs, tag = 'smem constant byte address 0x4 - core index']
  #allocation1 [shape = 'u32[72,128]{1,0:T(1,128)}', space=vmem, size = 0x9000, scoped, tag = 'internal scratch']
  %s0 = inlined_call_operand.vmem [shape: f32[2,128], index: 0, kind: input, shape index: {}]
  %s1 = inlined_call_operand.vmem [shape: f32[2,128], index: 1, kind: output, shape index: {0}]
  %s2 = inlined_call_operand.vmem [shape: f32[2,128], index: 2, kind: output, shape index: {1}]
  %3 = xla_tuple %s1, %s2
  %s4 = sld [smem:[#allocation0]]
  $region22: #{attention.1} parent=0
    _
  %s6 = ssub.s32 1, %s4
  %s7 = scalar_select 0, %s6, %s4
  // Predicated region
  $region2: #{attention.1} parent=0 // pred_check
    _
  $region3: #{attention.1} parent=0 // pred_check_branch
    %9 = sbr.rel (0) target = $region5
  $region4: #{attention.1} parent=0 // pred_region
    _
  $region5: #{attention.1} parent=0 // pred_fallthru
    _
  %v10 = vld [vmem:[%s0] sm:$0x3]
  %v11 = vtanh.pop %v10
  %v12 = vmul.f32 %v11, 1.442695
  %v13 = vpow.pop %v12
  %14 = vrot.lane.b32.xlu0 %v13, 32
  %v15 = vpop.permute.xlu0 %14
  %v16 = vadd.f32 %v13, %v15
  %17 = vrot.lane.b32.xlu0 %v16, 64
  %v18 = vpop.permute.xlu0 %17
  %v19 = vadd.f32 %v16, %v18
  %v20 = vrcp.pop %v19
  %v21 = vmul.f32 %v19, %v20
  %v22 = vsub.f32 1.0, %v21
  %v23 = vmul.f32 %v20, %v22
  %v24 = vadd.f32 %v20, %v23
  %vm25 = vweird.f32 %v19
  %vm26 = vweird.f32 %v20
  %vm27 = vmor %vm25, %vm26
  %v28 = vsel %vm27, %v20, %v24
  %v29 = vand.u32 2147483647, %v19
  %vm30 = vcmp.eq.f32.partialorder %v29, 8.507059e+37
  %v31 = vand.u32 %v19, 2147483648
  %v32 = vor.u32 1.1754944e-38, %v31
  %v33 = vsel %vm30, %v32, %v28
  %v34 = vmul.f32 %v13, %v33
  %35 = vst [vmem:[%s2] sm:$0x3] %v34
  %v36 = vmul.f32 %v13, %v10
  %v37 = vmul.f32 %v36, %v33
  %38 = vst [vmem:[%s1] sm:$0x3] %v37
  // Predicated region
  $region6: #{attention.1} parent=0 // pred_check
    _
  $region7: #{attention.1} parent=0 // pred_check_branch
    %40 = sbr.rel (0) target = $region9
  $region8: #{attention.1} parent=0 // pred_region
    _
  $region9: #{attention.1} parent=0 // pred_fallthru
    _
  // Predicated region
  $region10: #{attention.1} parent=0 // pred_check
    _
  $region11: #{attention.1} parent=0 // pred_check_branch
    %42 = sbr.rel (0) target = $region13
  $region12: #{attention.1} parent=0 // pred_region
    _
  $region13: #{attention.1} parent=0 // pred_fallthru
    _
  // Predicated region
  $region14: #{attention.1} parent=0 // pred_check
    _
  $region15: #{attention.1} parent=0 // pred_check_branch
    %44 = sbr.rel (0) target = $region17
  $region16: #{attention.1} parent=0 // pred_region
    _
  $region17: #{attention.1} parent=0 // pred_fallthru
    _
  // Predicated region
  $region18: #{attention.1} parent=0 // pred_check
    _
  $region19: #{attention.1} parent=0 // pred_check_branch
    %46 = sbr.rel (0) target = $region21
  $region20: #{attention.1} parent=0 // pred_region
    _
  $region21: #{attention.1} parent=0 // pred_fallthru
    _

</llo_original>
